<compile_context>
chip_gen: v7x
topology: tpu7x:2x2x1
jax: 0.10.0
libtpu: 0.0.40
codegen_flags: <defaults>
</compile_context>

<pallas_src>
import functools
import math

import jax
import jax.numpy as jnp
from jax.experimental import pallas as pl
from jax.experimental.pallas import tpu as pltpu


# ---------------------------------------------------------------------------
# Activation (matches get_activation in the PyTorch module)
# ---------------------------------------------------------------------------
def _apply_activation(x, activation: str, gelu_approximate: bool):
    if activation == "relu":
        return jnp.maximum(x, 0.0)
    elif activation == "gelu":
        # PyTorch F.gelu default is exact (erf).  Default here is the tanh form
        # (runs on the EUP slot, effectively free); set gelu_approximate=False
        # for exact PyTorch parity.
        return jax.nn.gelu(x, approximate=gelu_approximate)
    else:
        raise ValueError(f"Activation function {activation} not found")


# ---------------------------------------------------------------------------
# Pallas kernel: fused 5-layer MLP for one row-tile
# ---------------------------------------------------------------------------
def _aggregation_kernel(
    x_ref,
    w1_ref, b1_ref,
    w2_ref, b2_ref,
    w3_ref, b3_ref,
    w4_ref, b4_ref,
    w5_ref, b5_ref,
    o_ref,
    *,
    activation: str,
    gelu_approximate: bool,
):
    compute_dtype = w1_ref.dtype
    # In-kernel cast of the input rows (VPU work hidden under the MXU stream);
    # the wrapper does NOT pre-cast x, avoiding an extra full HBM pass.
    x = x_ref[...].astype(compute_dtype)

    def linear(h, w_ref, b_ref):
        # Weights already in compute dtype; accumulate on the MXU in f32.
        return (
            jnp.dot(h, w_ref[...], preferred_element_type=jnp.float32)
            + b_ref[...]
        )

    def act(h):
        return _apply_activation(h, activation, gelu_approximate)

    h = act(linear(x, w1_ref, b1_ref)).astype(compute_dtype)
    h = act(linear(h, w2_ref, b2_ref)).astype(compute_dtype)
    h = act(linear(h, w3_ref, b3_ref)).astype(compute_dtype)
    h = act(linear(h, w4_ref, b4_ref)).astype(compute_dtype)
    y = linear(h, w5_ref, b5_ref)  # final layer: no activation, f32 result

    o_ref[...] = y.astype(o_ref.dtype)


# ---------------------------------------------------------------------------
# Row-tile selection (perf-review items: bigger tiles, sublane/MXU alignment,
# keep >= ~8 grid steps on large M so both v7x TensorCores get work)
# ---------------------------------------------------------------------------
def _choose_row_tile(m: int, requested: int, compute_dtype) -> int:
    def round_up(v, k):
        return ((v + k - 1) // k) * k

    sub = 16 if jnp.dtype(compute_dtype).itemsize < 4 else 8  # sublane packing
    align = 256                                               # MXU-friendly

    tile = min(requested, round_up(pl.cdiv(m, 8), align))  # >= ~8 steps on big M
    tile = max(tile, sub)
    tile = min(tile, round_up(m, sub))                      # tiny-input clamp
    tile = round_up(tile, sub)
    return tile


# ---------------------------------------------------------------------------
# Wrapper: flattens leading dims, tiles over rows, calls pallas_call
# ---------------------------------------------------------------------------
def aggregation_model_forward(
    x,
    params,
    *,
    activation="relu",
    gelu_approximate=True,
    row_tile=4096,           # sweep 2048-8192 for your M / generation
    compute_dtype=jnp.bfloat16,
    out_dtype=None,          # default: same dtype as x (f32 parity); bf16 halves writeback
):
    """x: (..., input_features) -> (..., output_features)."""
    (w1, b1), (w2, b2), (w3, b3), (w4, b4), (w5, b5) = params
    in_f = w1.shape[0]
    out_f = w5.shape[1]
    out_dtype = x.dtype if out_dtype is None else out_dtype

    lead_shape = x.shape[:-1]
    m = math.prod(lead_shape) if lead_shape else 1

    tile = _choose_row_tile(m, row_tile, compute_dtype)

    # Collapse leading dims (metadata-only reshape); NO dtype cast here.
    x2 = x.reshape(m, in_f)

    # Weights cast once at trace time (tiny, one-shot).
    w1c, w2c, w3c, w4c, w5c = (
        w.astype(compute_dtype) for w in (w1, w2, w3, w4, w5)
    )
    # Biases as (1, features) f32 so bias-add + activation stay in f32.
    b1r, b2r, b3r, b4r, b5r = (
        b.reshape(1, -1).astype(jnp.float32) for b in (b1, b2, b3, b4, b5)
    )

    # No wrapper pad / output slice: ragged last block relies on Pallas masking
    # OOB output writes; rows are independent, so garbage padded input rows
    # cannot contaminate valid outputs.
    grid = (pl.cdiv(m, tile),)

    def row_spec(feat):
        return pl.BlockSpec((tile, feat), lambda i: (i, 0))

    def full_spec(shape):
        # Constant index_map -> weights/biases stay resident in VMEM.
        return pl.BlockSpec(shape, lambda i: (0, 0))

    kernel = functools.partial(
        _aggregation_kernel,
        activation=activation,
        gelu_approximate=gelu_approximate,
    )

    out = pl.pallas_call(
        kernel,
        out_shape=jax.ShapeDtypeStruct((m, out_f), out_dtype),
        grid_spec=pltpu.PrefetchScalarGridSpec(
            num_scalar_prefetch=0,
            grid=grid,
            in_specs=[
                row_spec(in_f),
                full_spec(w1c.shape), full_spec(b1r.shape),
                full_spec(w2c.shape), full_spec(b2r.shape),
                full_spec(w3c.shape), full_spec(b3r.shape),
                full_spec(w4c.shape), full_spec(b4r.shape),
                full_spec(w5c.shape), full_spec(b5r.shape),
            ],
            out_specs=row_spec(out_f),
        ),
        compiler_params=pltpu.CompilerParams(
            dimension_semantics=("parallel",),
        ),
    )(x2, w1c, b1r, w2c, b2r, w3c, b3r, w4c, b4r, w5c, b5r)

    return out.reshape(*lead_shape, out_f)


# ---------------------------------------------------------------------------
# Deterministic parameter initialization (shapes follow the module __init__)
# ---------------------------------------------------------------------------
def init_params(key, input_features, output_features, base_layer, dtype=jnp.float32):
    dims = [
        (input_features, base_layer),   # fc1
        (base_layer, base_layer),       # fc2
        (base_layer, base_layer),       # fc3
        (base_layer, base_layer),       # fc4
        (base_layer, output_features),  # fc5
    ]
    params = []
    for (fan_in, fan_out) in dims:
        key, kw, kb = jax.random.split(key, 3)
        bound = 1.0 / (fan_in ** 0.5)  # torch.nn.Linear default init bound
        w = jax.random.uniform(kw, (fan_in, fan_out), dtype, -bound, bound)
        b = jax.random.uniform(kb, (fan_out,), dtype, -bound, bound)
        params.append((w, b))
    return params


# ---------------------------------------------------------------------------
# Pure-JAX reference for correctness check
# ---------------------------------------------------------------------------
def reference_forward(x, params, activation="relu", gelu_approximate=True):
    (w1, b1), (w2, b2), (w3, b3), (w4, b4), (w5, b5) = params
    h = _apply_activation(x @ w1 + b1, activation, gelu_approximate)
    h = _apply_activation(h @ w2 + b2, activation, gelu_approximate)
    h = _apply_activation(h @ w3 + b3, activation, gelu_approximate)
    h = _apply_activation(h @ w4 + b4, activation, gelu_approximate)
    return h @ w5 + b5


if __name__ == "__main__":
    # Small shapes consistent with the module: combined features on the last
    # axis; model_parameters.base_layer = 64, activation = 'relu'.
    batch, npoints = 2, 8
    input_features, output_features, base_layer = 32, 16, 64
    activation = "relu"

    key = jax.random.PRNGKey(0)
    k_x, k_p = jax.random.split(key)

    x = jax.random.normal(k_x, (batch, npoints, input_features), jnp.float32)
    params = init_params(k_p, input_features, output_features, base_layer)
    ref = reference_forward(
        x.reshape(-1, input_features), params, activation
    ).reshape(batch, npoints, output_features)

    # 1) Exact-precision path (f32 compute) -> tight tolerance.
    out_f32 = aggregation_model_forward(
        x, params, activation=activation, compute_dtype=jnp.float32)
    out_f32 = jax.block_until_ready(out_f32)
    assert out_f32.shape == (batch, npoints, output_features)
    assert jnp.allclose(out_f32, ref, atol=1e-5, rtol=1e-5), "f32 mismatch vs reference"

    # 2) Default fast path (bf16 operands, f32 MXU accumulation) -> loose tolerance.
    out_bf16 = aggregation_model_forward(x, params, activation=activation)
    out_bf16 = jax.block_until_ready(out_bf16)
    assert out_bf16.shape == (batch, npoints, output_features)
    assert jnp.allclose(out_bf16, ref, atol=5e-2, rtol=5e-2), "bf16 mismatch vs reference"

    # 3) Ragged-grid path (no pad/slice): M=200 rows, row_tile=64 -> grid of 4
    #    with a partial last block, exercising Pallas OOB write masking.
    k_x2 = jax.random.fold_in(k_x, 1)
    x2 = jax.random.normal(k_x2, (200, input_features), jnp.float32)
    ref2 = reference_forward(x2, params, activation)
    out2 = aggregation_model_forward(
        x2, params, activation=activation, row_tile=64, compute_dtype=jnp.float32)
    out2 = jax.block_until_ready(out2)
    assert out2.shape == (200, output_features)
    assert jnp.allclose(out2, ref2, atol=1e-5, rtol=1e-5), "ragged-grid mismatch"

    # 4) GELU (tanh form) path, f32 compute -> tight tolerance vs same-form reference.
    ref3 = reference_forward(x2, params, "gelu", gelu_approximate=True)
    out3 = aggregation_model_forward(
        x2, params, activation="gelu", gelu_approximate=True,
        compute_dtype=jnp.float32)
    out3 = jax.block_until_ready(out3)
    assert jnp.allclose(out3, ref3, atol=1e-5, rtol=1e-5), "gelu mismatch vs reference"

    print("KERNEL_OK")
</pallas_src>

<mosaic_0001>
module attributes {stable_mosaic.version = 11 : i64} {
  func.func @_aggregation_kernel(%arg0: i32, %arg1: memref<16x32xf32, #tpu.memory_space<vmem>>, %arg2: memref<32x64xf32, #tpu.memory_space<vmem>>, %arg3: memref<1x64xf32, #tpu.memory_space<vmem>>, %arg4: memref<64x64xf32, #tpu.memory_space<vmem>>, %arg5: memref<1x64xf32, #tpu.memory_space<vmem>>, %arg6: memref<64x64xf32, #tpu.memory_space<vmem>>, %arg7: memref<1x64xf32, #tpu.memory_space<vmem>>, %arg8: memref<64x64xf32, #tpu.memory_space<vmem>>, %arg9: memref<1x64xf32, #tpu.memory_space<vmem>>, %arg10: memref<64x16xf32, #tpu.memory_space<vmem>>, %arg11: memref<1x16xf32, #tpu.memory_space<vmem>>, %arg12: memref<16x16xf32, #tpu.memory_space<vmem>>) attributes {dimension_semantics = [#tpu.dimension_semantics<parallel>], iteration_bounds = array<i64: 1>, scalar_prefetch = 0 : i64, scratch_operands = 0 : i64, tpu.core_type = #tpu.core_type<tc>, window_params = [{transform_indices = @transform_0, window_bounds = array<i64: 16, 32>}, {pipeline_mode = #tpu.pipeline_mode<synchronous>, transform_indices = @transform_1, window_bounds = array<i64: 32, 64>}, {pipeline_mode = #tpu.pipeline_mode<synchronous>, transform_indices = @transform_2, window_bounds = array<i64: 1, 64>}, {pipeline_mode = #tpu.pipeline_mode<synchronous>, transform_indices = @transform_3, window_bounds = array<i64: 64, 64>}, {pipeline_mode = #tpu.pipeline_mode<synchronous>, transform_indices = @transform_4, window_bounds = array<i64: 1, 64>}, {pipeline_mode = #tpu.pipeline_mode<synchronous>, transform_indices = @transform_5, window_bounds = array<i64: 64, 64>}, {pipeline_mode = #tpu.pipeline_mode<synchronous>, transform_indices = @transform_6, window_bounds = array<i64: 1, 64>}, {pipeline_mode = #tpu.pipeline_mode<synchronous>, transform_indices = @transform_7, window_bounds = array<i64: 64, 64>}, {pipeline_mode = #tpu.pipeline_mode<synchronous>, transform_indices = @transform_8, window_bounds = array<i64: 1, 64>}, {pipeline_mode = #tpu.pipeline_mode<synchronous>, transform_indices = @transform_9, window_bounds = array<i64: 64, 16>}, {pipeline_mode = #tpu.pipeline_mode<synchronous>, transform_indices = @transform_10, window_bounds = array<i64: 1, 16>}, {transform_indices = @transform_11, window_bounds = array<i64: 16, 16>}]} {
    %c0 = arith.constant 0 : index
    %c0_0 = arith.constant 0 : index
    %0 = vector.load %arg1[%c0, %c0_0] : memref<16x32xf32, #tpu.memory_space<vmem>>, vector<16x32xf32>
    %c0_1 = arith.constant 0 : index
    %c0_2 = arith.constant 0 : index
    %1 = vector.load %arg2[%c0_1, %c0_2] : memref<32x64xf32, #tpu.memory_space<vmem>>, vector<32x64xf32>
    %cst = arith.constant dense<0.000000e+00> : vector<16x64xf32>
    %2 = tpu.matmul %0, %1, %cst {dimension_numbers = #tpu.dot_dimension_numbers<[1], [0], [0], [1], [0, 0, 1, 1], [], []>} : vector<16x32xf32>, vector<32x64xf32>, vector<16x64xf32> -> vector<16x64xf32>
    %c0_3 = arith.constant 0 : index
    %c0_4 = arith.constant 0 : index
    %3 = vector.load %arg3[%c0_3, %c0_4] : memref<1x64xf32, #tpu.memory_space<vmem>>, vector<1x64xf32>
    %4 = vector.broadcast %3 : vector<1x64xf32> to vector<16x64xf32>
    %5 = arith.addf %2, %4 : vector<16x64xf32>
    %cst_5 = arith.constant 0.000000e+00 : f32
    %6 = vector.broadcast %cst_5 : f32 to vector<16x64xf32>
    %7 = arith.maximumf %5, %6 : vector<16x64xf32>
    %c0_6 = arith.constant 0 : index
    %c0_7 = arith.constant 0 : index
    %8 = vector.load %arg4[%c0_6, %c0_7] : memref<64x64xf32, #tpu.memory_space<vmem>>, vector<64x64xf32>
    %cst_8 = arith.constant dense<0.000000e+00> : vector<16x64xf32>
    %9 = tpu.matmul %7, %8, %cst_8 {dimension_numbers = #tpu.dot_dimension_numbers<[1], [0], [0], [1], [0, 0, 1, 1], [], []>} : vector<16x64xf32>, vector<64x64xf32>, vector<16x64xf32> -> vector<16x64xf32>
    %c0_9 = arith.constant 0 : index
    %c0_10 = arith.constant 0 : index
    %10 = vector.load %arg5[%c0_9, %c0_10] : memref<1x64xf32, #tpu.memory_space<vmem>>, vector<1x64xf32>
    %11 = vector.broadcast %10 : vector<1x64xf32> to vector<16x64xf32>
    %12 = arith.addf %9, %11 : vector<16x64xf32>
    %cst_11 = arith.constant 0.000000e+00 : f32
    %13 = vector.broadcast %cst_11 : f32 to vector<16x64xf32>
    %14 = arith.maximumf %12, %13 : vector<16x64xf32>
    %c0_12 = arith.constant 0 : index
    %c0_13 = arith.constant 0 : index
    %15 = vector.load %arg6[%c0_12, %c0_13] : memref<64x64xf32, #tpu.memory_space<vmem>>, vector<64x64xf32>
    %cst_14 = arith.constant dense<0.000000e+00> : vector<16x64xf32>
    %16 = tpu.matmul %14, %15, %cst_14 {dimension_numbers = #tpu.dot_dimension_numbers<[1], [0], [0], [1], [0, 0, 1, 1], [], []>} : vector<16x64xf32>, vector<64x64xf32>, vector<16x64xf32> -> vector<16x64xf32>
    %c0_15 = arith.constant 0 : index
    %c0_16 = arith.constant 0 : index
    %17 = vector.load %arg7[%c0_15, %c0_16] : memref<1x64xf32, #tpu.memory_space<vmem>>, vector<1x64xf32>
    %18 = vector.broadcast %17 : vector<1x64xf32> to vector<16x64xf32>
    %19 = arith.addf %16, %18 : vector<16x64xf32>
    %cst_17 = arith.constant 0.000000e+00 : f32
    %20 = vector.broadcast %cst_17 : f32 to vector<16x64xf32>
    %21 = arith.maximumf %19, %20 : vector<16x64xf32>
    %c0_18 = arith.constant 0 : index
    %c0_19 = arith.constant 0 : index
    %22 = vector.load %arg8[%c0_18, %c0_19] : memref<64x64xf32, #tpu.memory_space<vmem>>, vector<64x64xf32>
    %cst_20 = arith.constant dense<0.000000e+00> : vector<16x64xf32>
    %23 = tpu.matmul %21, %22, %cst_20 {dimension_numbers = #tpu.dot_dimension_numbers<[1], [0], [0], [1], [0, 0, 1, 1], [], []>} : vector<16x64xf32>, vector<64x64xf32>, vector<16x64xf32> -> vector<16x64xf32>
    %c0_21 = arith.constant 0 : index
    %c0_22 = arith.constant 0 : index
    %24 = vector.load %arg9[%c0_21, %c0_22] : memref<1x64xf32, #tpu.memory_space<vmem>>, vector<1x64xf32>
    %25 = vector.broadcast %24 : vector<1x64xf32> to vector<16x64xf32>
    %26 = arith.addf %23, %25 : vector<16x64xf32>
    %cst_23 = arith.constant 0.000000e+00 : f32
    %27 = vector.broadcast %cst_23 : f32 to vector<16x64xf32>
    %28 = arith.maximumf %26, %27 : vector<16x64xf32>
    %c0_24 = arith.constant 0 : index
    %c0_25 = arith.constant 0 : index
    %29 = vector.load %arg10[%c0_24, %c0_25] : memref<64x16xf32, #tpu.memory_space<vmem>>, vector<64x16xf32>
    %cst_26 = arith.constant dense<0.000000e+00> : vector<16x16xf32>
    %30 = tpu.matmul %28, %29, %cst_26 {dimension_numbers = #tpu.dot_dimension_numbers<[1], [0], [0], [1], [0, 0, 1, 1], [], []>} : vector<16x64xf32>, vector<64x16xf32>, vector<16x16xf32> -> vector<16x16xf32>
    %c0_27 = arith.constant 0 : index
    %c0_28 = arith.constant 0 : index
    %31 = vector.load %arg11[%c0_27, %c0_28] : memref<1x16xf32, #tpu.memory_space<vmem>>, vector<1x16xf32>
    %32 = vector.broadcast %31 : vector<1x16xf32> to vector<16x16xf32>
    %33 = arith.addf %30, %32 : vector<16x16xf32>
    %c0_29 = arith.constant 0 : index
    %c0_30 = arith.constant 0 : index
    %34 = vector.load %arg12[%c0_29, %c0_30] : memref<16x16xf32, #tpu.memory_space<vmem>>, vector<16x16xf32>
    tpu.vector_store %arg12[%c0_29, %c0_30], %33 {strides = array<i32>} : memref<16x16xf32, #tpu.memory_space<vmem>>, vector<16x16xf32>,
    return
  }
  func.func @transform_0(%arg0: i32) -> (i32, i32) {
    %c0_i32 = arith.constant 0 : i32
    %c0_i32_0 = arith.constant 0 : i32
    return %arg0, %c0_i32 : i32, i32
  }
  func.func @transform_1(%arg0: i32) -> (i32, i32) {
    %c0_i32 = arith.constant 0 : i32
    %c0_i32_0 = arith.constant 0 : i32
    %c0_i32_1 = arith.constant 0 : i32
    return %c0_i32, %c0_i32_0 : i32, i32
  }
  func.func @transform_2(%arg0: i32) -> (i32, i32) {
    %c0_i32 = arith.constant 0 : i32
    %c0_i32_0 = arith.constant 0 : i32
    %c0_i32_1 = arith.constant 0 : i32
    return %c0_i32, %c0_i32_0 : i32, i32
  }
  func.func @transform_3(%arg0: i32) -> (i32, i32) {
    %c0_i32 = arith.constant 0 : i32
    %c0_i32_0 = arith.constant 0 : i32
    %c0_i32_1 = arith.constant 0 : i32
    return %c0_i32, %c0_i32_0 : i32, i32
  }
  func.func @transform_4(%arg0: i32) -> (i32, i32) {
    %c0_i32 = arith.constant 0 : i32
    %c0_i32_0 = arith.constant 0 : i32
    %c0_i32_1 = arith.constant 0 : i32
    return %c0_i32, %c0_i32_0 : i32, i32
  }
  func.func @transform_5(%arg0: i32) -> (i32, i32) {
    %c0_i32 = arith.constant 0 : i32
    %c0_i32_0 = arith.constant 0 : i32
    %c0_i32_1 = arith.constant 0 : i32
    return %c0_i32, %c0_i32_0 : i32, i32
  }
  func.func @transform_6(%arg0: i32) -> (i32, i32) {
    %c0_i32 = arith.constant 0 : i32
    %c0_i32_0 = arith.constant 0 : i32
    %c0_i32_1 = arith.constant 0 : i32
    return %c0_i32, %c0_i32_0 : i32, i32
  }
  func.func @transform_7(%arg0: i32) -> (i32, i32) {
    %c0_i32 = arith.constant 0 : i32
    %c0_i32_0 = arith.constant 0 : i32
    %c0_i32_1 = arith.constant 0 : i32
    return %c0_i32, %c0_i32_0 : i32, i32
  }
  func.func @transform_8(%arg0: i32) -> (i32, i32) {
    %c0_i32 = arith.constant 0 : i32
    %c0_i32_0 = arith.constant 0 : i32
    %c0_i32_1 = arith.constant 0 : i32
    return %c0_i32, %c0_i32_0 : i32, i32
  }
  func.func @transform_9(%arg0: i32) -> (i32, i32) {
    %c0_i32 = arith.constant 0 : i32
    %c0_i32_0 = arith.constant 0 : i32
    %c0_i32_1 = arith.constant 0 : i32
    return %c0_i32, %c0_i32_0 : i32, i32
  }
  func.func @transform_10(%arg0: i32) -> (i32, i32) {
    %c0_i32 = arith.constant 0 : i32
    %c0_i32_0 = arith.constant 0 : i32
    %c0_i32_1 = arith.constant 0 : i32
    return %c0_i32, %c0_i32_0 : i32, i32
  }
  func.func @transform_11(%arg0: i32) -> (i32, i32) {
    %c0_i32 = arith.constant 0 : i32
    %c0_i32_0 = arith.constant 0 : i32
    return %arg0, %c0_i32 : i32, i32
  }
}

</mosaic_0001>

<llo_original>
// kernel: tpu_custom_call.1
$region0: #{tpu_custom_call.1}
  #allocation0 [shape = 'u32[]', space=smem, size = 0x4, offset = 0x4, fixed_abs, tag = 'smem constant byte address 0x4 - core index']
  #allocation1 [shape = 'u32[144,128]{1,0:T(1,128)}', space=vmem, size = 0x12000, scoped, tag = 'internal scratch']
  %s0 = inlined_call_operand.vmem [shape: f32[16,32], index: 0, kind: input, shape index: {}]
  %s1 = inlined_call_operand.hbm [shape: f32[32,64], index: 1, kind: input, shape index: {}]
  %s2 = inlined_call_operand.vmem [shape: f32[1,64], index: 2, kind: input, shape index: {}]
  %s3 = inlined_call_operand.vmem [shape: f32[64,64], index: 3, kind: input, shape index: {}]
  %s4 = inlined_call_operand.vmem [shape: f32[1,64], index: 4, kind: input, shape index: {}]
  %s5 = inlined_call_operand.hbm [shape: f32[64,64], index: 5, kind: input, shape index: {}]
  %s6 = inlined_call_operand.vmem [shape: f32[1,64], index: 6, kind: input, shape index: {}]
  %s7 = inlined_call_operand.hbm [shape: f32[64,64], index: 7, kind: input, shape index: {}]
  %s8 = inlined_call_operand.vmem [shape: f32[1,64], index: 8, kind: input, shape index: {}]
  %s9 = inlined_call_operand.vmem [shape: f32[64,16], index: 9, kind: input, shape index: {}]
  %s10 = inlined_call_operand.vmem [shape: f32[1,16], index: 10, kind: input, shape index: {}]
  %s11 = inlined_call_operand.hbm [shape: f32[16,16], index: 11, kind: output, shape index: {}]
  %s12 = sld [smem:[#allocation0]]
  $region66: #{tpu_custom_call.1} parent=0
    _
  %s14 = ssub.s32 1, %s12
  %s15 = scalar_select 0, %s14, %s12
  $region1: #{tpu_custom_call.1} parent=0
    #allocation2 [shape = 'u8[16384]{0}', space=vmem, size = 0x4000, scoped, tag = 'input window, operand 1, single buffered']
    #allocation3 [shape = 's32[1]{0}', space=sflag, size = 0x4, scoped, tag = 'scoped memory for tpu_custom_call.1']
    #allocation4 [shape = 's32[1]{0}', space=sflag, size = 0x4, scoped, tag = 'scoped memory for tpu_custom_call.1']
    #allocation5 [shape = 'u8[32768]{0}', space=vmem, size = 0x8000, scoped, tag = 'input window, operand 5, single buffered']
    #allocation6 [shape = 's32[1]{0}', space=sflag, size = 0x4, scoped, tag = 'scoped memory for tpu_custom_call.1']
    #allocation7 [shape = 'u8[32768]{0}', space=vmem, size = 0x8000, scoped, tag = 'input window, operand 7, single buffered']
    #allocation8 [shape = 'u8[8192]{0}', space=vmem, size = 0x2000, scoped, tag = 'output window, operand 0, single buffered']
    %16 = vsyncpa [#allocation3], 0
    %17 = vsyncpa [#allocation6], 0
    %18 = vsyncpa [#allocation4], 0
    // Predicated region
    $region2: #{tpu_custom_call.1} parent=1 // pred_check
      _
    $region3: #{tpu_custom_call.1} parent=1 // pred_check_branch
      %20 = sbr.rel (0) target = $region5
    $region4: #{tpu_custom_call.1} parent=1 // pred_region
      _
    $region5: #{tpu_custom_call.1} parent=1 // pred_fallthru
      _
    // Predicated region
    $region6: #{tpu_custom_call.1} parent=1 // pred_check
      _
    $region7: #{tpu_custom_call.1} parent=1 // pred_check_branch
      %22 = sbr.rel (0) target = $region9
    $region8: #{tpu_custom_call.1} parent=1 // pred_region
      %s24 = ssub.s32 512, 512
      %25 = vsyncadd [#allocation3], %s24
      %s26 = sshll.u32 [#allocation2], 4
      %s27 = int_to_ptr.vmem [resolvable:$true] %s26
      %32 = dma.hbm_to_vmem [thread:$0]  %s1, 512, %s27, [#allocation3], 128, 128, 8
    $region9: #{tpu_custom_call.1} parent=1 // pred_fallthru
      _
    // Predicated region
    $region10: #{tpu_custom_call.1} parent=1 // pred_check
      _
    $region11: #{tpu_custom_call.1} parent=1 // pred_check_branch
      %34 = sbr.rel (0) target = $region13
    $region12: #{tpu_custom_call.1} parent=1 // pred_region
      _
    $region13: #{tpu_custom_call.1} parent=1 // pred_fallthru
      _
    // Predicated region
    $region14: #{tpu_custom_call.1} parent=1 // pred_check
      _
    $region15: #{tpu_custom_call.1} parent=1 // pred_check_branch
      %36 = sbr.rel (0) target = $region17
    $region16: #{tpu_custom_call.1} parent=1 // pred_region
      _
    $region17: #{tpu_custom_call.1} parent=1 // pred_fallthru
      _
    // Predicated region
    $region18: #{tpu_custom_call.1} parent=1 // pred_check
      _
    $region19: #{tpu_custom_call.1} parent=1 // pred_check_branch
      %38 = sbr.rel (0) target = $region21
    $region20: #{tpu_custom_call.1} parent=1 // pred_region
      _
    $region21: #{tpu_custom_call.1} parent=1 // pred_fallthru
      _
    // Predicated region
    $region22: #{tpu_custom_call.1} parent=1 // pred_check
      _
    $region23: #{tpu_custom_call.1} parent=1 // pred_check_branch
      %40 = sbr.rel (0) target = $region25
    $region24: #{tpu_custom_call.1} parent=1 // pred_region
      %s42 = ssub.s32 1024, 1024
      %43 = vsyncadd [#allocation6], %s42
      %s44 = sshll.u32 [#allocation5], 4
      %s45 = int_to_ptr.vmem [resolvable:$true] %s44
      %50 = dma.hbm_to_vmem [thread:$0]  %s5, 1024, %s45, [#allocation6], 128, 128, 8
    $region25: #{tpu_custom_call.1} parent=1 // pred_fallthru
      _
    // Predicated region
    $region26: #{tpu_custom_call.1} parent=1 // pred_check
      _
    $region27: #{tpu_custom_call.1} parent=1 // pred_check_branch
      %52 = sbr.rel (0) target = $region29
    $region28: #{tpu_custom_call.1} parent=1 // pred_region
      _
    $region29: #{tpu_custom_call.1} parent=1 // pred_fallthru
      _
    // Predicated region
    $region30: #{tpu_custom_call.1} parent=1 // pred_check
      _
    $region31: #{tpu_custom_call.1} parent=1 // pred_check_branch
      %54 = sbr.rel (0) target = $region33
    $region32: #{tpu_custom_call.1} parent=1 // pred_region
      %s56 = ssub.s32 1024, 1024
      %57 = vsyncadd [#allocation6], %s56
      %s58 = sshll.u32 [#allocation7], 4
      %s59 = int_to_ptr.vmem [resolvable:$true] %s58
      %64 = dma.hbm_to_vmem [thread:$0]  %s7, 1024, %s59, [#allocation6], 128, 128, 8
    $region33: #{tpu_custom_call.1} parent=1 // pred_fallthru
      _
    // Predicated region
    $region34: #{tpu_custom_call.1} parent=1 // pred_check
      _
    $region35: #{tpu_custom_call.1} parent=1 // pred_check_branch
      %66 = sbr.rel (0) target = $region37
    $region36: #{tpu_custom_call.1} parent=1 // pred_region
      _
    $region37: #{tpu_custom_call.1} parent=1 // pred_fallthru
      _
    // Predicated region
    $region38: #{tpu_custom_call.1} parent=1 // pred_check
      _
    $region39: #{tpu_custom_call.1} parent=1 // pred_check_branch
      %68 = sbr.rel (0) target = $region41
    $region40: #{tpu_custom_call.1} parent=1 // pred_region
      _
    $region41: #{tpu_custom_call.1} parent=1 // pred_fallthru
      _
    // Predicated region
    $region42: #{tpu_custom_call.1} parent=1 // pred_check
      _
    $region43: #{tpu_custom_call.1} parent=1 // pred_check_branch
      %70 = sbr.rel (0) target = $region45
    $region44: #{tpu_custom_call.1} parent=1 // pred_region
      _
    $region45: #{tpu_custom_call.1} parent=1 // pred_fallthru
      _
    // Predicated region
    $region46: #{tpu_custom_call.1} parent=1 // pred_check
      _
    $region47: #{tpu_custom_call.1} parent=1 // pred_check_branch
      %72 = sbr.rel (0) target = $region49
    $region48: #{tpu_custom_call.1} parent=1 // pred_region
      %73 = dma.done [#allocation3], 512
    $region49: #{tpu_custom_call.1} parent=1 // pred_fallthru
      _
    // Predicated region
    $region50: #{tpu_custom_call.1} parent=1 // pred_check
      _
    $region51: #{tpu_custom_call.1} parent=1 // pred_check_branch
      %75 = sbr.rel (0) target = $region53
    $region52: #{tpu_custom_call.1} parent=1 // pred_region
      %76 = dma.done [#allocation6], 1024
    $region53: #{tpu_custom_call.1} parent=1 // pred_fallthru
      _
    // Predicated region
    $region54: #{tpu_custom_call.1} parent=1 // pred_check
      _
    $region55: #{tpu_custom_call.1} parent=1 // pred_check_branch
      %78 = sbr.rel (0) target = $region57
    $region56: #{tpu_custom_call.1} parent=1 // pred_region
      %79 = dma.done [#allocation6], 1024
    $region57: #{tpu_custom_call.1} parent=1 // pred_fallthru
      _
    %v80 = vld [vmem:[%s0] sm:$0xff]
    %v81 = vld [vmem:[%s0 + $0x8] sm:$0xff]
    %v82 = vld [vmem:[#allocation2] sm:$0xff]
    %v83 = vld [vmem:[#allocation2 + $0x8] sm:$0xff]
    %v84 = vld [vmem:[#allocation2 + $0x10] sm:$0xff]
    %v85 = vld [vmem:[#allocation2 + $0x18] sm:$0xff]
    %v86 = vld [vmem:[%s2] sm:$0x1]
    %v88 = vlaneseq
    %v89 = vshrl.u32 %v88, 7
    %v90 = vsub.s32 0, %v89
    %v91 = vrot.slane %v86, %v90
    %vm93 = vcmask 261120
    %v95 = vsel %vm93, %v80, 0
    %v98 = vsel %vm93, %v81, 0
    %100 = vmatprep.subr.mxu0 0.0
    %101 = vmatpush1.msra.mxu0 %v82
    %102 = vmatprep.subr.mxu0 0.0
    %103 = vmatpush1.msra.mxu0 %v83
    %104 = vmatprep.subr.mxu0 0.0
    %105 = vmatpush1.msra.mxu0 %v84
    %106 = vmatprep.subr.mxu0 0.0
    %107 = vmatpush1.msra.mxu0 %v85
    %108 = vmatprep.subr.mxu0 0.0
    %109 = vmatpush1.msra.mxu0 0.0
    %110 = vmatprep.subr.mxu0 0.0
    %111 = vmatpush1.msra.mxu0 0.0
    %112 = vmatprep.subr.mxu0 0.0
    %113 = vmatpush1.msra.mxu0 0.0
    %114 = vmatprep.subr.mxu0 0.0
    %115 = vmatpush1.msra.mxu0 0.0
    %116 = vmatprep.subr.mxu0 0.0
    %117 = vmatpush1.msra.mxu0 0.0
    %118 = vmatprep.subr.mxu0 0.0
    %119 = vmatpush1.msra.mxu0 0.0
    %120 = vmatprep.subr.mxu0 0.0
    %121 = vmatpush1.msra.mxu0 0.0
    %122 = vmatprep.subr.mxu0 0.0
    %123 = vmatpush1.msra.mxu0 0.0
    %124 = vmatprep.subr.mxu0 0.0
    %125 = vmatpush1.msra.mxu0 0.0
    %126 = vmatprep.subr.mxu0 0.0
    %127 = vmatpush1.msra.mxu0 0.0
    %128 = vmatprep.subr.mxu0 0.0
    %129 = vmatpush1.msra.mxu0 0.0
    %130 = vmatprep.subr.mxu0 0.0
    %131 = vmatpush1.msra.mxu0 0.0
    %132 = vmatprep.subr.mxu0 0.0
    %133 = vmatpush1.msra.mxu0 0.0
    %134 = vmatprep.subr.mxu0 0.0
    %135 = vmatpush1.msra.mxu0 0.0
    %136 = vmatprep.subr.mxu0 0.0
    %137 = vmatpush1.msra.mxu0 0.0
    %138 = vmatprep.subr.mxu0 0.0
    %139 = vmatpush1.msra.mxu0 0.0
    %140 = vmatprep.subr.mxu0 0.0
    %141 = vmatpush1.msra.mxu0 0.0
    %142 = vmatprep.subr.mxu0 0.0
    %143 = vmatpush1.msra.mxu0 0.0
    %144 = vmatprep.subr.mxu0 0.0
    %145 = vmatpush1.msra.mxu0 0.0
    %146 = vmatprep.subr.mxu0 0.0
    %147 = vmatpush1.msra.mxu0 0.0
    %148 = vmatprep.subr.mxu0 0.0
    %149 = vmatpush1.msra.mxu0 0.0
    %150 = vmatprep.subr.mxu0 0.0
    %151 = vmatpush1.msra.mxu0 0.0
    %152 = vmatprep.subr.mxu0 0.0
    %153 = vmatpush1.msra.mxu0 0.0
    %154 = vmatprep.subr.mxu0 0.0
    %155 = vmatpush1.msra.mxu0 0.0
    %156 = vmatprep.subr.mxu0 0.0
    %157 = vmatpush1.msra.mxu0 0.0
    %158 = vmatprep.subr.mxu0 0.0
    %159 = vmatpush1.msra.mxu0 0.0
    %160 = vmatprep.subr.mxu0 0.0
    %161 = vmatpush1.msra.mxu0 0.0
    %162 = vmatprep.subr.mxu0 0.0
    %163 = vmatpush1.msra.mxu0 0.0
    %164 = vmatprep.mubr.f32.mxu0 0.0
    %165 = vmatmul.mubr.f32.gmra.mrb[0].mxu0 %v95
    %v166 = vpop.f32.mrb[0].mxu0
    %v167 = vadd.f32 %v91, %v166
    %v168 = vpop.f32.mrb[0].mxu0
    %169 = vmatprep.mubr.f32.mxu0 0.0
    %170 = vmatmul.mubr.f32.gmra.mrb[0].mxu0 %v98
    %v171 = vpop.f32.mrb[0].mxu0
    %v172 = vadd.f32 %v91, %v171
    %v173 = vpop.f32.mrb[0].mxu0
    %174 = vdwg.mxu0
    %v175 = vmax.f32 %v167, 0.0
    %v176 = vmax.f32 %v172, 0.0
    %v177 = vld [vmem:[%s3] sm:$0xff]
    %v178 = vld [vmem:[%s3 + $0x8] sm:$0xff]
    %v179 = vld [vmem:[%s3 + $0x10] sm:$0xff]
    %v180 = vld [vmem:[%s3 + $0x18] sm:$0xff]
    %v181 = vld [vmem:[%s3 + $0x20] sm:$0xff]
    %v182 = vld [vmem:[%s3 + $0x28] sm:$0xff]
    %v183 = vld [vmem:[%s3 + $0x30] sm:$0xff]
    %v184 = vld [vmem:[%s3 + $0x38] sm:$0xff]
    %v185 = vld [vmem:[%s4] sm:$0x1]
    %v187 = vlaneseq
    %v188 = vshrl.u32 %v187, 7
    %v189 = vsub.s32 0, %v188
    %v190 = vrot.slane %v185, %v189
    %vm192 = vcmask 523264
    %v194 = vsel %vm192, %v175, 0
    %v197 = vsel %vm192, %v176, 0
    %199 = vmatprep.subr.mxu0 0.0
    %200 = vmatpush1.msra.mxu0 %v177
    %201 = vmatprep.subr.mxu0 0.0
    %202 = vmatpush1.msra.mxu0 %v178
    %203 = vmatprep.subr.mxu0 0.0
    %204 = vmatpush1.msra.mxu0 %v179
    %205 = vmatprep.subr.mxu0 0.0
    %206 = vmatpush1.msra.mxu0 %v180
    %207 = vmatprep.subr.mxu0 0.0
    %208 = vmatpush1.msra.mxu0 %v181
    %209 = vmatprep.subr.mxu0 0.0
    %210 = vmatpush1.msra.mxu0 %v182
    %211 = vmatprep.subr.mxu0 0.0
    %212 = vmatpush1.msra.mxu0 %v183
    %213 = vmatprep.subr.mxu0 0.0
    %214 = vmatpush1.msra.mxu0 %v184
    %215 = vmatprep.subr.mxu0 0.0
    %216 = vmatpush1.msra.mxu0 0.0
    %217 = vmatprep.subr.mxu0 0.0
    %218 = vmatpush1.msra.mxu0 0.0
    %219 = vmatprep.subr.mxu0 0.0
    %220 = vmatpush1.msra.mxu0 0.0
    %221 = vmatprep.subr.mxu0 0.0
    %222 = vmatpush1.msra.mxu0 0.0
    %223 = vmatprep.subr.mxu0 0.0
    %224 = vmatpush1.msra.mxu0 0.0
    %225 = vmatprep.subr.mxu0 0.0
    %226 = vmatpush1.msra.mxu0 0.0
    %227 = vmatprep.subr.mxu0 0.0
    %228 = vmatpush1.msra.mxu0 0.0
    %229 = vmatprep.subr.mxu0 0.0
    %230 = vmatpush1.msra.mxu0 0.0
    %231 = vmatprep.subr.mxu0 0.0
    %232 = vmatpush1.msra.mxu0 0.0
    %233 = vmatprep.subr.mxu0 0.0
    %234 = vmatpush1.msra.mxu0 0.0
    %235 = vmatprep.subr.mxu0 0.0
    %236 = vmatpush1.msra.mxu0 0.0
    %237 = vmatprep.subr.mxu0 0.0
    %238 = vmatpush1.msra.mxu0 0.0
    %239 = vmatprep.subr.mxu0 0.0
    %240 = vmatpush1.msra.mxu0 0.0
    %241 = vmatprep.subr.mxu0 0.0
    %242 = vmatpush1.msra.mxu0 0.0
    %243 = vmatprep.subr.mxu0 0.0
    %244 = vmatpush1.msra.mxu0 0.0
    %245 = vmatprep.subr.mxu0 0.0
    %246 = vmatpush1.msra.mxu0 0.0
    %247 = vmatprep.subr.mxu0 0.0
    %248 = vmatpush1.msra.mxu0 0.0
    %249 = vmatprep.subr.mxu0 0.0
    %250 = vmatpush1.msra.mxu0 0.0
    %251 = vmatprep.subr.mxu0 0.0
    %252 = vmatpush1.msra.mxu0 0.0
    %253 = vmatprep.subr.mxu0 0.0
    %254 = vmatpush1.msra.mxu0 0.0
    %255 = vmatprep.subr.mxu0 0.0
    %256 = vmatpush1.msra.mxu0 0.0
    %257 = vmatprep.subr.mxu0 0.0
    %258 = vmatpush1.msra.mxu0 0.0
    %259 = vmatprep.subr.mxu0 0.0
    %260 = vmatpush1.msra.mxu0 0.0
    %261 = vmatprep.subr.mxu0 0.0
    %262 = vmatpush1.msra.mxu0 0.0
    %263 = vmatprep.mubr.f32.mxu0 0.0
    %264 = vmatmul.mubr.f32.gmra.mrb[0].mxu0 %v194
    %v265 = vpop.f32.mrb[0].mxu0
    %v266 = vadd.f32 %v190, %v265
    %v267 = vpop.f32.mrb[0].mxu0
    %268 = vmatprep.mubr.f32.mxu0 0.0
    %269 = vmatmul.mubr.f32.gmra.mrb[0].mxu0 %v197
    %v270 = vpop.f32.mrb[0].mxu0
    %v271 = vadd.f32 %v190, %v270
    %v272 = vpop.f32.mrb[0].mxu0
    %273 = vdwg.mxu0
    %v274 = vmax.f32 %v266, 0.0
    %v275 = vmax.f32 %v271, 0.0
    %v276 = vld [vmem:[#allocation5] sm:$0xff]
    %v277 = vld [vmem:[#allocation5 + $0x8] sm:$0xff]
    %v278 = vld [vmem:[#allocation5 + $0x10] sm:$0xff]
    %v279 = vld [vmem:[#allocation5 + $0x18] sm:$0xff]
    %v280 = vld [vmem:[#allocation5 + $0x20] sm:$0xff]
    %v281 = vld [vmem:[#allocation5 + $0x28] sm:$0xff]
    %v282 = vld [vmem:[#allocation5 + $0x30] sm:$0xff]
    %v283 = vld [vmem:[#allocation5 + $0x38] sm:$0xff]
    %v284 = vld [vmem:[%s6] sm:$0x1]
    %v286 = vlaneseq
    %v287 = vshrl.u32 %v286, 7
    %v288 = vsub.s32 0, %v287
    %v289 = vrot.slane %v284, %v288
    %v292 = vsel %vm192, %v274, 0
    %v295 = vsel %vm192, %v275, 0
    %297 = vmatprep.subr.mxu0 0.0
    %298 = vmatpush1.msra.mxu0 %v276
    %299 = vmatprep.subr.mxu0 0.0
    %300 = vmatpush1.msra.mxu0 %v277
    %301 = vmatprep.subr.mxu0 0.0
    %302 = vmatpush1.msra.mxu0 %v278
    %303 = vmatprep.subr.mxu0 0.0
    %304 = vmatpush1.msra.mxu0 %v279
    %305 = vmatprep.subr.mxu0 0.0
    %306 = vmatpush1.msra.mxu0 %v280
    %307 = vmatprep.subr.mxu0 0.0
    %308 = vmatpush1.msra.mxu0 %v281
    %309 = vmatprep.subr.mxu0 0.0
    %310 = vmatpush1.msra.mxu0 %v282
    %311 = vmatprep.subr.mxu0 0.0
    %312 = vmatpush1.msra.mxu0 %v283
    %313 = vmatprep.subr.mxu0 0.0
    %314 = vmatpush1.msra.mxu0 0.0
    %315 = vmatprep.subr.mxu0 0.0
    %316 = vmatpush1.msra.mxu0 0.0
    %317 = vmatprep.subr.mxu0 0.0
    %318 = vmatpush1.msra.mxu0 0.0
    %319 = vmatprep.subr.mxu0 0.0
    %320 = vmatpush1.msra.mxu0 0.0
    %321 = vmatprep.subr.mxu0 0.0
    %322 = vmatpush1.msra.mxu0 0.0
    %323 = vmatprep.subr.mxu0 0.0
    %324 = vmatpush1.msra.mxu0 0.0
    %325 = vmatprep.subr.mxu0 0.0
    %326 = vmatpush1.msra.mxu0 0.0
    %327 = vmatprep.subr.mxu0 0.0
    %328 = vmatpush1.msra.mxu0 0.0
    %329 = vmatprep.subr.mxu0 0.0
    %330 = vmatpush1.msra.mxu0 0.0
    %331 = vmatprep.subr.mxu0 0.0
    %332 = vmatpush1.msra.mxu0 0.0
    %333 = vmatprep.subr.mxu0 0.0
    %334 = vmatpush1.msra.mxu0 0.0
    %335 = vmatprep.subr.mxu0 0.0
    %336 = vmatpush1.msra.mxu0 0.0
    %337 = vmatprep.subr.mxu0 0.0
    %338 = vmatpush1.msra.mxu0 0.0
    %339 = vmatprep.subr.mxu0 0.0
    %340 = vmatpush1.msra.mxu0 0.0
    %341 = vmatprep.subr.mxu0 0.0
    %342 = vmatpush1.msra.mxu0 0.0
    %343 = vmatprep.subr.mxu0 0.0
    %344 = vmatpush1.msra.mxu0 0.0
    %345 = vmatprep.subr.mxu0 0.0
    %346 = vmatpush1.msra.mxu0 0.0
    %347 = vmatprep.subr.mxu0 0.0
    %348 = vmatpush1.msra.mxu0 0.0
    %349 = vmatprep.subr.mxu0 0.0
    %350 = vmatpush1.msra.mxu0 0.0
    %351 = vmatprep.subr.mxu0 0.0
    %352 = vmatpush1.msra.mxu0 0.0
    %353 = vmatprep.subr.mxu0 0.0
    %354 = vmatpush1.msra.mxu0 0.0
    %355 = vmatprep.subr.mxu0 0.0
    %356 = vmatpush1.msra.mxu0 0.0
    %357 = vmatprep.subr.mxu0 0.0
    %358 = vmatpush1.msra.mxu0 0.0
    %359 = vmatprep.subr.mxu0 0.0
    %360 = vmatpush1.msra.mxu0 0.0
    %361 = vmatprep.mubr.f32.mxu0 0.0
    %362 = vmatmul.mubr.f32.gmra.mrb[0].mxu0 %v292
    %v363 = vpop.f32.mrb[0].mxu0
    %v364 = vadd.f32 %v289, %v363
    %v365 = vpop.f32.mrb[0].mxu0
    %366 = vmatprep.mubr.f32.mxu0 0.0
    %367 = vmatmul.mubr.f32.gmra.mrb[0].mxu0 %v295
    %v368 = vpop.f32.mrb[0].mxu0
    %v369 = vadd.f32 %v289, %v368
    %v370 = vpop.f32.mrb[0].mxu0
    %371 = vdwg.mxu0
    %v372 = vmax.f32 %v364, 0.0
    %v373 = vmax.f32 %v369, 0.0
    %v374 = vld [vmem:[#allocation7] sm:$0xff]
    %v375 = vld [vmem:[#allocation7 + $0x8] sm:$0xff]
    %v376 = vld [vmem:[#allocation7 + $0x10] sm:$0xff]
    %v377 = vld [vmem:[#allocation7 + $0x18] sm:$0xff]
    %v378 = vld [vmem:[#allocation7 + $0x20] sm:$0xff]
    %v379 = vld [vmem:[#allocation7 + $0x28] sm:$0xff]
    %v380 = vld [vmem:[#allocation7 + $0x30] sm:$0xff]
    %v381 = vld [vmem:[#allocation7 + $0x38] sm:$0xff]
    %v382 = vld [vmem:[%s8] sm:$0x1]
    %v384 = vlaneseq
    %v385 = vshrl.u32 %v384, 7
    %v386 = vsub.s32 0, %v385
    %v387 = vrot.slane %v382, %v386
    %v390 = vsel %vm192, %v372, 0
    %v393 = vsel %vm192, %v373, 0
    %395 = vmatprep.subr.mxu0 0.0
    %396 = vmatpush1.msra.mxu0 %v374
    %397 = vmatprep.subr.mxu0 0.0
    %398 = vmatpush1.msra.mxu0 %v375
    %399 = vmatprep.subr.mxu0 0.0
    %400 = vmatpush1.msra.mxu0 %v376
    %401 = vmatprep.subr.mxu0 0.0
    %402 = vmatpush1.msra.mxu0 %v377
    %403 = vmatprep.subr.mxu0 0.0
    %404 = vmatpush1.msra.mxu0 %v378
    %405 = vmatprep.subr.mxu0 0.0
    %406 = vmatpush1.msra.mxu0 %v379
    %407 = vmatprep.subr.mxu0 0.0
    %408 = vmatpush1.msra.mxu0 %v380
    %409 = vmatprep.subr.mxu0 0.0
    %410 = vmatpush1.msra.mxu0 %v381
    %411 = vmatprep.subr.mxu0 0.0
    %412 = vmatpush1.msra.mxu0 0.0
    %413 = vmatprep.subr.mxu0 0.0
    %414 = vmatpush1.msra.mxu0 0.0
    %415 = vmatprep.subr.mxu0 0.0
    %416 = vmatpush1.msra.mxu0 0.0
    %417 = vmatprep.subr.mxu0 0.0
    %418 = vmatpush1.msra.mxu0 0.0
    %419 = vmatprep.subr.mxu0 0.0
    %420 = vmatpush1.msra.mxu0 0.0
    %421 = vmatprep.subr.mxu0 0.0
    %422 = vmatpush1.msra.mxu0 0.0
    %423 = vmatprep.subr.mxu0 0.0
    %424 = vmatpush1.msra.mxu0 0.0
    %425 = vmatprep.subr.mxu0 0.0
    %426 = vmatpush1.msra.mxu0 0.0
    %427 = vmatprep.subr.mxu0 0.0
    %428 = vmatpush1.msra.mxu0 0.0
    %429 = vmatprep.subr.mxu0 0.0
    %430 = vmatpush1.msra.mxu0 0.0
    %431 = vmatprep.subr.mxu0 0.0
    %432 = vmatpush1.msra.mxu0 0.0
    %433 = vmatprep.subr.mxu0 0.0
    %434 = vmatpush1.msra.mxu0 0.0
    %435 = vmatprep.subr.mxu0 0.0
    %436 = vmatpush1.msra.mxu0 0.0
    %437 = vmatprep.subr.mxu0 0.0
    %438 = vmatpush1.msra.mxu0 0.0
    %439 = vmatprep.subr.mxu0 0.0
    %440 = vmatpush1.msra.mxu0 0.0
    %441 = vmatprep.subr.mxu0 0.0
    %442 = vmatpush1.msra.mxu0 0.0
    %443 = vmatprep.subr.mxu0 0.0
    %444 = vmatpush1.msra.mxu0 0.0
    %445 = vmatprep.subr.mxu0 0.0
    %446 = vmatpush1.msra.mxu0 0.0
    %447 = vmatprep.subr.mxu0 0.0
    %448 = vmatpush1.msra.mxu0 0.0
    %449 = vmatprep.subr.mxu0 0.0
    %450 = vmatpush1.msra.mxu0 0.0
    %451 = vmatprep.subr.mxu0 0.0
    %452 = vmatpush1.msra.mxu0 0.0
    %453 = vmatprep.subr.mxu0 0.0
    %454 = vmatpush1.msra.mxu0 0.0
    %455 = vmatprep.subr.mxu0 0.0
    %456 = vmatpush1.msra.mxu0 0.0
    %457 = vmatprep.subr.mxu0 0.0
    %458 = vmatpush1.msra.mxu0 0.0
    %459 = vmatprep.mubr.f32.mxu0 0.0
    %460 = vmatmul.mubr.f32.gmra.mrb[0].mxu0 %v390
    %v461 = vpop.f32.mrb[0].mxu0
    %v462 = vadd.f32 %v387, %v461
    %v463 = vpop.f32.mrb[0].mxu0
    %464 = vmatprep.mubr.f32.mxu0 0.0
    %465 = vmatmul.mubr.f32.gmra.mrb[0].mxu0 %v393
    %v466 = vpop.f32.mrb[0].mxu0
    %v467 = vadd.f32 %v387, %v466
    %v468 = vpop.f32.mrb[0].mxu0
    %469 = vdwg.mxu0
    %v470 = vmax.f32 %v462, 0.0
    %v471 = vmax.f32 %v467, 0.0
    %v472 = vld [vmem:[%s9] sm:$0xff]
    %v473 = vld [vmem:[%s9 + $0x8] sm:$0xff]
    %v474 = vld [vmem:[%s9 + $0x10] sm:$0xff]
    %v475 = vld [vmem:[%s9 + $0x18] sm:$0xff]
    %v476 = vld [vmem:[%s9 + $0x20] sm:$0xff]
    %v477 = vld [vmem:[%s9 + $0x28] sm:$0xff]
    %v478 = vld [vmem:[%s9 + $0x30] sm:$0xff]
    %v479 = vld [vmem:[%s9 + $0x38] sm:$0xff]
    %v480 = vld [vmem:[%s10] sm:$0x1]
    %v482 = vlaneseq
    %v483 = vshrl.u32 %v482, 7
    %v484 = vsub.s32 0, %v483
    %v485 = vrot.slane %v480, %v484
    %v488 = vsel %vm192, %v470, 0
    %v491 = vsel %vm192, %v471, 0
    %493 = vmatprep.subr.mxu0 0.0
    %494 = vmatpush1.msra.mxu0 %v472
    %495 = vmatprep.subr.mxu0 0.0
    %496 = vmatpush1.msra.mxu0 %v473
    %497 = vmatprep.subr.mxu0 0.0
    %498 = vmatpush1.msra.mxu0 %v474
    %499 = vmatprep.subr.mxu0 0.0
    %500 = vmatpush1.msra.mxu0 %v475
    %501 = vmatprep.subr.mxu0 0.0
    %502 = vmatpush1.msra.mxu0 %v476
    %503 = vmatprep.subr.mxu0 0.0
    %504 = vmatpush1.msra.mxu0 %v477
    %505 = vmatprep.subr.mxu0 0.0
    %506 = vmatpush1.msra.mxu0 %v478
    %507 = vmatprep.subr.mxu0 0.0
    %508 = vmatpush1.msra.mxu0 %v479
    %509 = vmatprep.subr.mxu0 0.0
    %510 = vmatpush1.msra.mxu0 0.0
    %511 = vmatprep.subr.mxu0 0.0
    %512 = vmatpush1.msra.mxu0 0.0
    %513 = vmatprep.subr.mxu0 0.0
    %514 = vmatpush1.msra.mxu0 0.0
    %515 = vmatprep.subr.mxu0 0.0
    %516 = vmatpush1.msra.mxu0 0.0
    %517 = vmatprep.subr.mxu0 0.0
    %518 = vmatpush1.msra.mxu0 0.0
    %519 = vmatprep.subr.mxu0 0.0
    %520 = vmatpush1.msra.mxu0 0.0
    %521 = vmatprep.subr.mxu0 0.0
    %522 = vmatpush1.msra.mxu0 0.0
    %523 = vmatprep.subr.mxu0 0.0
    %524 = vmatpush1.msra.mxu0 0.0
    %525 = vmatprep.subr.mxu0 0.0
    %526 = vmatpush1.msra.mxu0 0.0
    %527 = vmatprep.subr.mxu0 0.0
    %528 = vmatpush1.msra.mxu0 0.0
    %529 = vmatprep.subr.mxu0 0.0
    %530 = vmatpush1.msra.mxu0 0.0
    %531 = vmatprep.subr.mxu0 0.0
    %532 = vmatpush1.msra.mxu0 0.0
    %533 = vmatprep.subr.mxu0 0.0
    %534 = vmatpush1.msra.mxu0 0.0
    %535 = vmatprep.subr.mxu0 0.0
    %536 = vmatpush1.msra.mxu0 0.0
    %537 = vmatprep.subr.mxu0 0.0
    %538 = vmatpush1.msra.mxu0 0.0
    %539 = vmatprep.subr.mxu0 0.0
    %540 = vmatpush1.msra.mxu0 0.0
    %541 = vmatprep.subr.mxu0 0.0
    %542 = vmatpush1.msra.mxu0 0.0
    %543 = vmatprep.subr.mxu0 0.0
    %544 = vmatpush1.msra.mxu0 0.0
    %545 = vmatprep.subr.mxu0 0.0
    %546 = vmatpush1.msra.mxu0 0.0
    %547 = vmatprep.subr.mxu0 0.0
    %548 = vmatpush1.msra.mxu0 0.0
    %549 = vmatprep.subr.mxu0 0.0
    %550 = vmatpush1.msra.mxu0 0.0
    %551 = vmatprep.subr.mxu0 0.0
    %552 = vmatpush1.msra.mxu0 0.0
    %553 = vmatprep.subr.mxu0 0.0
    %554 = vmatpush1.msra.mxu0 0.0
    %555 = vmatprep.subr.mxu0 0.0
    %556 = vmatpush1.msra.mxu0 0.0
    %557 = vmatprep.mubr.f32.mxu0 0.0
    %558 = vmatmul.mubr.f32.gmra.mrb[0].mxu0 %v488
    %v559 = vpop.f32.mrb[0].mxu0
    %v560 = vadd.f32 %v485, %v559
    %v561 = vpop.f32.mrb[0].mxu0
    %562 = vmatprep.mubr.f32.mxu0 0.0
    %563 = vmatmul.mubr.f32.gmra.mrb[0].mxu0 %v491
    %v564 = vpop.f32.mrb[0].mxu0
    %v565 = vadd.f32 %v485, %v564
    %v566 = vpop.f32.mrb[0].mxu0
    %567 = vdwg.mxu0
    %vm568 = vcmask 130048
    %569 = vst.msk [vmem:[#allocation8] sm:$0xff] %vm568, %v560
    %570 = vst.msk [vmem:[#allocation8 + $0x8] sm:$0xff] %vm568, %v565
    // Predicated region
    $region58: #{tpu_custom_call.1} parent=1 // pred_check
      _
    $region59: #{tpu_custom_call.1} parent=1 // pred_check_branch
      %572 = sbr.rel (0) target = $region61
    $region60: #{tpu_custom_call.1} parent=1 // pred_region
      %s574 = ssub.s32 256, 256
      %575 = vsyncadd [#allocation4], %s574
      %s576 = sshll.u32 [#allocation8], 4
      %s577 = int_to_ptr.vmem [resolvable:$true] %s576
      %582 = dma.vmem_to_hbm [thread:$0]  %s577, 256, %s11, [#allocation4], 128, 128, 8
    $region61: #{tpu_custom_call.1} parent=1 // pred_fallthru
      _
    // Predicated region
    $region62: #{tpu_custom_call.1} parent=1 // pred_check
      _
    $region63: #{tpu_custom_call.1} parent=1 // pred_check_branch
      %584 = sbr.rel (0) target = $region65
    $region64: #{tpu_custom_call.1} parent=1 // pred_region
      %585 = dma.done [#allocation4], 256
    $region65: #{tpu_custom_call.1} parent=1 // pred_fallthru
      _
    %586 = vsyncpa [#allocation3], 1
    %587 = vsyncpa [#allocation6], 1
    %588 = vsyncpa [#allocation4], 1

</llo_original>
